<compile_context>
chip_gen: v7x
topology: tpu7x:2x2x1
jax: 0.10.0
libtpu: 0.0.40
codegen_flags: <defaults>
</compile_context>

<pallas_src>
import functools

import jax
import jax.numpy as jnp
import numpy as np
from jax.experimental import pallas as pl
from jax.experimental.pallas import tpu as pltpu

EPS = 1e-5


def _round_up(a, b):
    return (a + b - 1) // b * b


def factorized_reduce(x_ncdhw, w1, w2, gamma, beta, *,
                      compute_dtype=jnp.float32,
                      max_tile_m=65536,
                      vmem_tile_budget=16 * 1024 * 1024):
    """x_ncdhw: (N, C_in, D, H, W); w1/w2: (C_in, C_out//2); gamma/beta: (C_out,)."""
    N, Cin, D, H, W = x_ncdhw.shape
    Coh = w1.shape[1]
    Cout = 2 * Coh
    Do, Ho, Wo = -(-D // 2), -(-H // 2), -(-W // 2)
    Ms = Do * Ho * Wo                      # output positions per sample
    M_total = N * Ms

    x = x_ncdhw.astype(compute_dtype)

    # Strided samples for conv1 (even) and conv2 (odd, i.e. the pad-then-shift
    # path). Only the 1/8-sized odd tensor is padded; relu(0) = 0, so the
    # padded boundary contributes exactly the zeros the PyTorch path produces
    # (and those positions ARE counted in the BN statistics, as in PyTorch).
    xe = x[:, :, ::2, ::2, ::2]                                   # (N,Cin,Do,Ho,Wo)
    xo = x[:, :, 1::2, 1::2, 1::2]
    xo = jnp.pad(xo, [(0, 0), (0, 0),
                      (0, Do - xo.shape[2]),
                      (0, Ho - xo.shape[3]),
                      (0, Wo - xo.shape[4])])
    xe = xe.reshape(N, Cin, Ms)                                   # pure reshapes
    xo = xo.reshape(N, Cin, Ms)

    w1t = jnp.asarray(w1, jnp.float32).T.astype(compute_dtype)    # (Coh, Cin)
    w2t = jnp.asarray(w2, jnp.float32).T.astype(compute_dtype)

    # ---- tile selection: HBM-bound -> biggest tile that fits the VMEM budget.
    in_b = np.dtype(compute_dtype).itemsize
    bytes_per_lane = 2 * Cin * in_b + Cout * 4          # xe+xo tiles + f32 out tile
    tm_cap = (vmem_tile_budget // (2 * bytes_per_lane)) // 512 * 512   # x2 = double buffer
    tm_cap = max(512, min(tm_cap, max_tile_m))
    tm = Ms if Ms <= tm_cap else tm_cap
    if N == 1 and tm >= Ms and Ms > 1024:
        tm = _round_up(-(-Ms // 2), 512)                 # >=2 tiles -> both v7x TCs busy
    n_tiles = -(-Ms // tm)
    grid = (N, n_tiles)
    ragged = (Ms % tm) != 0

    xe_spec = pl.BlockSpec((None, Cin, tm), lambda n, i: (n, 0, i))
    xo_spec = pl.BlockSpec((None, Cin, tm), lambda n, i: (n, 0, i))
    w_spec = pl.BlockSpec((Coh, Cin), lambda n, i: (0, 0))
    acc_spec = pl.BlockSpec((None, Cout, 1), lambda n, i: (n, 0, 0))
    vec_spec = pl.BlockSpec((Cout, 1), lambda n, i: (0, 0))
    out_spec = pl.BlockSpec((None, Cout, tm), lambda n, i: (n, 0, i))

    vmem_limit = 32 * 1024 * 1024     # safe on v5e/v6e/v7x; tiles use far less

    # ---------------- pass 1: per-sample channel sum / sum-of-squares --------
    def stats_kernel(xe_ref, xo_ref, w1_ref, w2_ref, sum_ref, sq_ref):
        i = pl.program_id(1)

        @pl.when(i == 0)
        def _init():
            sum_ref[...] = jnp.zeros_like(sum_ref)
            sq_ref[...] = jnp.zeros_like(sq_ref)

        y1 = jnp.dot(w1_ref[...], jnp.maximum(xe_ref[...], 0),
                     preferred_element_type=jnp.float32)          # (Coh, tm) MXU
        y2 = jnp.dot(w2_ref[...], jnp.maximum(xo_ref[...], 0),
                     preferred_element_type=jnp.float32)
        if ragged:
            # Mask the ragged tail of the last tile: edge-block loads beyond
            # the array bound are not guaranteed to be zero.
            lane = jax.lax.broadcasted_iota(jnp.int32, y1.shape, 1)
            valid = (i * tm + lane) < Ms
            y1 = jnp.where(valid, y1, 0.0)
            y2 = jnp.where(valid, y2, 0.0)
        s = jnp.concatenate([jnp.sum(y1, axis=1, keepdims=True),
                             jnp.sum(y2, axis=1, keepdims=True)], axis=0)
        q = jnp.concatenate([jnp.sum(y1 * y1, axis=1, keepdims=True),
                             jnp.sum(y2 * y2, axis=1, keepdims=True)], axis=0)
        sum_ref[...] += s
        sq_ref[...] += q

    ssum, ssq = pl.pallas_call(
        stats_kernel,
        out_shape=(jax.ShapeDtypeStruct((N, Cout, 1), jnp.float32),
                   jax.ShapeDtypeStruct((N, Cout, 1), jnp.float32)),
        grid=grid,
        in_specs=[xe_spec, xo_spec, w_spec, w_spec],
        out_specs=(acc_spec, acc_spec),
        compiler_params=pltpu.CompilerParams(
            dimension_semantics=("parallel", "arbitrary"),
            vmem_limit_bytes=vmem_limit),
        cost_estimate=pl.CostEstimate(
            flops=2 * M_total * 2 * Cin * Coh + 3 * M_total * Cout,
            transcendentals=0,
            bytes_accessed=2 * Cin * M_total * in_b + 2 * N * Cout * 4),
    )(xe, xo, w1t, w2t)

    # BN batch stats (biased variance) -> fused per-channel scale/shift (f32).
    total_sum = jnp.sum(ssum, axis=0)                             # (Cout, 1)
    total_sq = jnp.sum(ssq, axis=0)
    mean = total_sum / M_total
    var = jnp.maximum(total_sq / M_total - mean * mean, 0.0)
    inv = jax.lax.rsqrt(var + EPS)
    g = jnp.asarray(gamma, jnp.float32).reshape(Cout, 1)
    b = jnp.asarray(beta, jnp.float32).reshape(Cout, 1)
    scale = g * inv
    shift = b - mean * scale

    # ---------------- pass 2: recompute y per tile, apply fused BN -----------
    def norm_kernel(xe_ref, xo_ref, w1_ref, w2_ref, scale_ref, shift_ref, out_ref):
        y1 = jnp.dot(w1_ref[...], jnp.maximum(xe_ref[...], 0),
                     preferred_element_type=jnp.float32)
        y2 = jnp.dot(w2_ref[...], jnp.maximum(xo_ref[...], 0),
                     preferred_element_type=jnp.float32)
        y = jnp.concatenate([y1, y2], axis=0)                     # (Cout, tm) VMEM only
        out_ref[...] = (y * scale_ref[...] + shift_ref[...]).astype(out_ref.dtype)

    y3d = pl.pallas_call(
        norm_kernel,
        out_shape=jax.ShapeDtypeStruct((N, Cout, Ms), jnp.float32),
        grid=grid,
        in_specs=[xe_spec, xo_spec, w_spec, w_spec, vec_spec, vec_spec],
        out_specs=out_spec,
        compiler_params=pltpu.CompilerParams(
            dimension_semantics=("parallel", "parallel"),
            vmem_limit_bytes=vmem_limit),
        cost_estimate=pl.CostEstimate(
            flops=2 * M_total * 2 * Cin * Coh + 2 * M_total * Cout,
            transcendentals=0,
            bytes_accessed=(2 * Cin * in_b + Cout * 4) * M_total),
    )(xe, xo, w1t, w2t, scale, shift)

    # Output is already per-sample channel-major -> final NCDHW is a free reshape.
    return y3d.reshape(N, Cout, Do, Ho, Wo)


# -------------------- pure-JAX reference (for validation) --------------------
def factorized_reduce_ref(x, w1, w2, gamma, beta):
    N, Cin, D, H, W = x.shape
    xr = jnp.maximum(x.astype(jnp.float32), 0.0)
    k1 = jnp.transpose(w1, (1, 0))[:, :, None, None, None]       # OIDHW
    k2 = jnp.transpose(w2, (1, 0))[:, :, None, None, None]
    dn = ("NCDHW", "OIDHW", "NCDHW")
    y1 = jax.lax.conv_general_dilated(xr, k1, (2, 2, 2), "VALID", dimension_numbers=dn)
    xp = jnp.pad(xr, [(0, 0), (0, 0), (0, D % 2), (0, H % 2), (0, W % 2)])[:, :, 1:, 1:, 1:]
    y2 = jax.lax.conv_general_dilated(xp, k2, (2, 2, 2), "VALID", dimension_numbers=dn)
    y = jnp.concatenate([y1, y2], axis=1)
    mean = y.mean(axis=(0, 2, 3, 4), keepdims=True)
    var = ((y - mean) ** 2).mean(axis=(0, 2, 3, 4), keepdims=True)
    g = gamma.reshape(1, -1, 1, 1, 1)
    b = beta.reshape(1, -1, 1, 1, 1)
    return (y - mean) / jnp.sqrt(var + EPS) * g + b


if __name__ == "__main__":
    key = jax.random.PRNGKey(0)
    k_x, k_w1, k_w2 = jax.random.split(key, 3)

    # Small shapes consistent with the module: N=2, C_in=4, C_out=8,
    # spatial (5, 6, 7) exercises both even and odd dims (padding path).
    N, C_in, C_out = 2, 4, 8
    D, H, W = 5, 6, 7
    Coh = C_out // 2

    x = jax.random.normal(k_x, (N, C_in, D, H, W), dtype=jnp.float32)
    # PyTorch Conv3d weights are (C_out//2, C_in, 1, 1, 1); stored here as the
    # equivalent (C_in, C_out//2) matmul matrices.
    w1 = 0.1 * jax.random.normal(k_w1, (C_in, Coh), dtype=jnp.float32)
    w2 = 0.1 * jax.random.normal(k_w2, (C_in, Coh), dtype=jnp.float32)
    gamma = jnp.ones((C_out,), jnp.float32)   # BatchNorm3d affine defaults
    beta = jnp.zeros((C_out,), jnp.float32)

    Do, Ho, Wo = -(-D // 2), -(-H // 2), -(-W // 2)

    # f32 path: exact parity with the conv/BN reference.
    out = jax.block_until_ready(jax.jit(factorized_reduce)(x, w1, w2, gamma, beta))
    ref = jax.block_until_ready(factorized_reduce_ref(x, w1, w2, gamma, beta))
    assert out.shape == (N, C_out, Do, Ho, Wo), out.shape
    assert np.allclose(np.asarray(out), np.asarray(ref), atol=1e-4, rtol=1e-4)

    # Multi-tile grid + ragged last-tile masking path (force small tiles).
    D2, H2, W2 = 17, 16, 15                                      # Ms = 9*8*8 = 576
    x2 = jax.random.normal(k_x, (N, C_in, D2, H2, W2), dtype=jnp.float32)
    ref2 = factorized_reduce_ref(x2, w1, w2, gamma, beta)
    small_tile = jax.jit(functools.partial(factorized_reduce, max_tile_m=512))
    out2 = jax.block_until_ready(small_tile(x2, w1, w2, gamma, beta))
    assert np.allclose(np.asarray(out2), np.asarray(ref2), atol=1e-4, rtol=1e-4)

    # bf16 activation slab (v6e/v7x HBM-traffic option); looser tolerance.
    bf16_fn = jax.jit(functools.partial(factorized_reduce, compute_dtype=jnp.bfloat16))
    out_bf = jax.block_until_ready(bf16_fn(x2, w1, w2, gamma, beta))
    assert np.allclose(np.asarray(out_bf), np.asarray(ref2), atol=5e-2, rtol=5e-2)

    print("KERNEL_OK")
</pallas_src>

<mosaic_0001>
module attributes {stable_mosaic.version = 11 : i64} {
  func.func @stats_kernel(%arg0: i32, %arg1: i32, %arg2: memref<1x4x36xf32, #tpu.memory_space<vmem>>, %arg3: memref<1x4x36xf32, #tpu.memory_space<vmem>>, %arg4: memref<4x4xf32, #tpu.memory_space<vmem>>, %arg5: memref<4x4xf32, #tpu.memory_space<vmem>>, %arg6: memref<1x8x1xf32, #tpu.memory_space<vmem>>, %arg7: memref<1x8x1xf32, #tpu.memory_space<vmem>>) attributes {dimension_semantics = [#tpu.dimension_semantics<parallel>, #tpu.dimension_semantics<arbitrary>], iteration_bounds = array<i64: 2, 1>, scalar_prefetch = 0 : i64, scratch_operands = 0 : i64, tpu.core_type = #tpu.core_type<tc>, window_params = [{transform_indices = @transform_0, window_bounds = array<i64: 1, 4, 36>}, {transform_indices = @transform_1, window_bounds = array<i64: 1, 4, 36>}, {pipeline_mode = #tpu.pipeline_mode<synchronous>, transform_indices = @transform_2, window_bounds = array<i64: 4, 4>}, {pipeline_mode = #tpu.pipeline_mode<synchronous>, transform_indices = @transform_3, window_bounds = array<i64: 4, 4>}, {transform_indices = @transform_4, window_bounds = array<i64: 1, 8, 1>}, {transform_indices = @transform_5, window_bounds = array<i64: 1, 8, 1>}]} {
    %c0_i32 = arith.constant 0 : i32
    %0 = arith.cmpi eq, %arg1, %c0_i32 : i32
    %1 = arith.extui %0 : i1 to i32
    %c0_i32_0 = arith.constant 0 : i32
    %2 = arith.cmpi ne, %1, %c0_i32_0 : i32
    scf.if %2 {
      %cst_29 = arith.constant 0.000000e+00 : f32
      %39 = vector.broadcast %cst_29 : f32 to vector<8x1xf32>
      %c0_30 = arith.constant 0 : index
      %c0_31 = arith.constant 0 : index
      %c0_32 = arith.constant 0 : index
      %40 = vector.load %arg6[%c0_30, %c0_31, %c0_32] : memref<1x8x1xf32, #tpu.memory_space<vmem>>, vector<1x8x1xf32>
      %41 = vector.shape_cast %40 : vector<1x8x1xf32> to vector<8x1xf32>
      %42 = vector.shape_cast %39 : vector<8x1xf32> to vector<1x8x1xf32>
      tpu.vector_store %arg6[%c0_30, %c0_31, %c0_32], %42 {strides = array<i32>} : memref<1x8x1xf32, #tpu.memory_space<vmem>>, vector<1x8x1xf32>,
      %cst_33 = arith.constant 0.000000e+00 : f32
      %43 = vector.broadcast %cst_33 : f32 to vector<8x1xf32>
      %c0_34 = arith.constant 0 : index
      %c0_35 = arith.constant 0 : index
      %c0_36 = arith.constant 0 : index
      %44 = vector.load %arg7[%c0_34, %c0_35, %c0_36] : memref<1x8x1xf32, #tpu.memory_space<vmem>>, vector<1x8x1xf32>
      %45 = vector.shape_cast %44 : vector<1x8x1xf32> to vector<8x1xf32>
      %46 = vector.shape_cast %43 : vector<8x1xf32> to vector<1x8x1xf32>
      tpu.vector_store %arg7[%c0_34, %c0_35, %c0_36], %46 {strides = array<i32>} : memref<1x8x1xf32, #tpu.memory_space<vmem>>, vector<1x8x1xf32>,
    } else {
    }
    %c0 = arith.constant 0 : index
    %c0_1 = arith.constant 0 : index
    %3 = vector.load %arg4[%c0, %c0_1] : memref<4x4xf32, #tpu.memory_space<vmem>>, vector<4x4xf32>
    %c0_2 = arith.constant 0 : index
    %c0_3 = arith.constant 0 : index
    %c0_4 = arith.constant 0 : index
    %4 = vector.load %arg2[%c0_2, %c0_3, %c0_4] : memref<1x4x36xf32, #tpu.memory_space<vmem>>, vector<1x4x36xf32>
    %5 = vector.shape_cast %4 : vector<1x4x36xf32> to vector<4x36xf32>
    %cst = arith.constant 0.000000e+00 : f32
    %6 = vector.broadcast %cst : f32 to vector<4x36xf32>
    %7 = arith.maximumf %5, %6 : vector<4x36xf32>
    %cst_5 = arith.constant dense<0.000000e+00> : vector<4x36xf32>
    %8 = tpu.matmul %3, %7, %cst_5 {dimension_numbers = #tpu.dot_dimension_numbers<[1], [0], [0], [1], [0, 0, 1, 1], [], []>} : vector<4x4xf32>, vector<4x36xf32>, vector<4x36xf32> -> vector<4x36xf32>
    %c0_6 = arith.constant 0 : index
    %c0_7 = arith.constant 0 : index
    %9 = vector.load %arg5[%c0_6, %c0_7] : memref<4x4xf32, #tpu.memory_space<vmem>>, vector<4x4xf32>
    %c0_8 = arith.constant 0 : index
    %c0_9 = arith.constant 0 : index
    %c0_10 = arith.constant 0 : index
    %10 = vector.load %arg3[%c0_8, %c0_9, %c0_10] : memref<1x4x36xf32, #tpu.memory_space<vmem>>, vector<1x4x36xf32>
    %11 = vector.shape_cast %10 : vector<1x4x36xf32> to vector<4x36xf32>
    %cst_11 = arith.constant 0.000000e+00 : f32
    %12 = vector.broadcast %cst_11 : f32 to vector<4x36xf32>
    %13 = arith.maximumf %11, %12 : vector<4x36xf32>
    %cst_12 = arith.constant dense<0.000000e+00> : vector<4x36xf32>
    %14 = tpu.matmul %9, %13, %cst_12 {dimension_numbers = #tpu.dot_dimension_numbers<[1], [0], [0], [1], [0, 0, 1, 1], [], []>} : vector<4x4xf32>, vector<4x36xf32>, vector<4x36xf32> -> vector<4x36xf32>
    %cst_13 = arith.constant dense<0.000000e+00> : vector<4xf32>
    %15 = vector.multi_reduction <add>, %8, %cst_13 [1] : vector<4x36xf32> to vector<4xf32>
    %16 = vector.shape_cast %15 : vector<4xf32> to vector<4x1xf32>
    %cst_14 = arith.constant dense<0.000000e+00> : vector<4xf32>
    %17 = vector.multi_reduction <add>, %14, %cst_14 [1] : vector<4x36xf32> to vector<4xf32>
    %18 = vector.shape_cast %17 : vector<4xf32> to vector<4x1xf32>
    %19 = tpu.concatenate %16, %18 in 0 : vector<4x1xf32>, vector<4x1xf32> -> vector<8x1xf32>
    %20 = arith.mulf %8, %8 : vector<4x36xf32>
    %cst_15 = arith.constant dense<0.000000e+00> : vector<4xf32>
    %21 = vector.multi_reduction <add>, %20, %cst_15 [1] : vector<4x36xf32> to vector<4xf32>
    %22 = vector.shape_cast %21 : vector<4xf32> to vector<4x1xf32>
    %23 = arith.mulf %14, %14 : vector<4x36xf32>
    %cst_16 = arith.constant dense<0.000000e+00> : vector<4xf32>
    %24 = vector.multi_reduction <add>, %23, %cst_16 [1] : vector<4x36xf32> to vector<4xf32>
    %25 = vector.shape_cast %24 : vector<4xf32> to vector<4x1xf32>
    %26 = tpu.concatenate %22, %25 in 0 : vector<4x1xf32>, vector<4x1xf32> -> vector<8x1xf32>
    %c0_17 = arith.constant 0 : index
    %c0_18 = arith.constant 0 : index
    %c0_19 = arith.constant 0 : index
    %27 = vector.load %arg6[%c0_17, %c0_18, %c0_19] : memref<1x8x1xf32, #tpu.memory_space<vmem>>, vector<1x8x1xf32>
    %28 = vector.shape_cast %27 : vector<1x8x1xf32> to vector<8x1xf32>
    %29 = arith.addf %28, %19 : vector<8x1xf32>
    %c0_20 = arith.constant 0 : index
    %c0_21 = arith.constant 0 : index
    %c0_22 = arith.constant 0 : index
    %30 = vector.load %arg6[%c0_20, %c0_21, %c0_22] : memref<1x8x1xf32, #tpu.memory_space<vmem>>, vector<1x8x1xf32>
    %31 = vector.shape_cast %30 : vector<1x8x1xf32> to vector<8x1xf32>
    %32 = vector.shape_cast %29 : vector<8x1xf32> to vector<1x8x1xf32>
    tpu.vector_store %arg6[%c0_20, %c0_21, %c0_22], %32 {strides = array<i32>} : memref<1x8x1xf32, #tpu.memory_space<vmem>>, vector<1x8x1xf32>,
    %c0_23 = arith.constant 0 : index
    %c0_24 = arith.constant 0 : index
    %c0_25 = arith.constant 0 : index
    %33 = vector.load %arg7[%c0_23, %c0_24, %c0_25] : memref<1x8x1xf32, #tpu.memory_space<vmem>>, vector<1x8x1xf32>
    %34 = vector.shape_cast %33 : vector<1x8x1xf32> to vector<8x1xf32>
    %35 = arith.addf %34, %26 : vector<8x1xf32>
    %c0_26 = arith.constant 0 : index
    %c0_27 = arith.constant 0 : index
    %c0_28 = arith.constant 0 : index
    %36 = vector.load %arg7[%c0_26, %c0_27, %c0_28] : memref<1x8x1xf32, #tpu.memory_space<vmem>>, vector<1x8x1xf32>
    %37 = vector.shape_cast %36 : vector<1x8x1xf32> to vector<8x1xf32>
    %38 = vector.shape_cast %35 : vector<8x1xf32> to vector<1x8x1xf32>
    tpu.vector_store %arg7[%c0_26, %c0_27, %c0_28], %38 {strides = array<i32>} : memref<1x8x1xf32, #tpu.memory_space<vmem>>, vector<1x8x1xf32>,
    return
  }
  func.func @transform_0(%arg0: i32, %arg1: i32) -> (i32, i32, i32) {
    %c0_i32 = arith.constant 0 : i32
    %c0_i32_0 = arith.constant 0 : i32
    return %arg0, %c0_i32, %arg1 : i32, i32, i32
  }
  func.func @transform_1(%arg0: i32, %arg1: i32) -> (i32, i32, i32) {
    %c0_i32 = arith.constant 0 : i32
    %c0_i32_0 = arith.constant 0 : i32
    return %arg0, %c0_i32, %arg1 : i32, i32, i32
  }
  func.func @transform_2(%arg0: i32, %arg1: i32) -> (i32, i32) {
    %c0_i32 = arith.constant 0 : i32
    %c0_i32_0 = arith.constant 0 : i32
    %c0_i32_1 = arith.constant 0 : i32
    return %c0_i32, %c0_i32_0 : i32, i32
  }
  func.func @transform_3(%arg0: i32, %arg1: i32) -> (i32, i32) {
    %c0_i32 = arith.constant 0 : i32
    %c0_i32_0 = arith.constant 0 : i32
    %c0_i32_1 = arith.constant 0 : i32
    return %c0_i32, %c0_i32_0 : i32, i32
  }
  func.func @transform_4(%arg0: i32, %arg1: i32) -> (i32, i32, i32) {
    %c0_i32 = arith.constant 0 : i32
    %c0_i32_0 = arith.constant 0 : i32
    %c0_i32_1 = arith.constant 0 : i32
    return %arg0, %c0_i32, %c0_i32_0 : i32, i32, i32
  }
  func.func @transform_5(%arg0: i32, %arg1: i32) -> (i32, i32, i32) {
    %c0_i32 = arith.constant 0 : i32
    %c0_i32_0 = arith.constant 0 : i32
    %c0_i32_1 = arith.constant 0 : i32
    return %arg0, %c0_i32, %c0_i32_0 : i32, i32, i32
  }
}

module attributes {stable_mosaic.version = 11 : i64} {
  func.func @norm_kernel(%arg0: i32, %arg1: i32, %arg2: memref<1x4x36xf32, #tpu.memory_space<vmem>>, %arg3: memref<1x4x36xf32, #tpu.memory_space<vmem>>, %arg4: memref<4x4xf32, #tpu.memory_space<vmem>>, %arg5: memref<4x4xf32, #tpu.memory_space<vmem>>, %arg6: memref<8x1xf32, #tpu.memory_space<vmem>>, %arg7: memref<8x1xf32, #tpu.memory_space<vmem>>, %arg8: memref<1x8x36xf32, #tpu.memory_space<vmem>>) attributes {dimension_semantics = [#tpu.dimension_semantics<parallel>, #tpu.dimension_semantics<parallel>], iteration_bounds = array<i64: 2, 1>, scalar_prefetch = 0 : i64, scratch_operands = 0 : i64, tpu.core_type = #tpu.core_type<tc>, window_params = [{transform_indices = @transform_0, window_bounds = array<i64: 1, 4, 36>}, {transform_indices = @transform_1, window_bounds = array<i64: 1, 4, 36>}, {pipeline_mode = #tpu.pipeline_mode<synchronous>, transform_indices = @transform_2, window_bounds = array<i64: 4, 4>}, {pipeline_mode = #tpu.pipeline_mode<synchronous>, transform_indices = @transform_3, window_bounds = array<i64: 4, 4>}, {pipeline_mode = #tpu.pipeline_mode<synchronous>, transform_indices = @transform_4, window_bounds = array<i64: 8, 1>}, {pipeline_mode = #tpu.pipeline_mode<synchronous>, transform_indices = @transform_5, window_bounds = array<i64: 8, 1>}, {transform_indices = @transform_6, window_bounds = array<i64: 1, 8, 36>}]} {
    %c0 = arith.constant 0 : index
    %c0_0 = arith.constant 0 : index
    %0 = vector.load %arg4[%c0, %c0_0] : memref<4x4xf32, #tpu.memory_space<vmem>>, vector<4x4xf32>
    %c0_1 = arith.constant 0 : index
    %c0_2 = arith.constant 0 : index
    %c0_3 = arith.constant 0 : index
    %1 = vector.load %arg2[%c0_1, %c0_2, %c0_3] : memref<1x4x36xf32, #tpu.memory_space<vmem>>, vector<1x4x36xf32>
    %2 = vector.shape_cast %1 : vector<1x4x36xf32> to vector<4x36xf32>
    %cst = arith.constant 0.000000e+00 : f32
    %3 = vector.broadcast %cst : f32 to vector<4x36xf32>
    %4 = arith.maximumf %2, %3 : vector<4x36xf32>
    %cst_4 = arith.constant dense<0.000000e+00> : vector<4x36xf32>
    %5 = tpu.matmul %0, %4, %cst_4 {dimension_numbers = #tpu.dot_dimension_numbers<[1], [0], [0], [1], [0, 0, 1, 1], [], []>} : vector<4x4xf32>, vector<4x36xf32>, vector<4x36xf32> -> vector<4x36xf32>
    %c0_5 = arith.constant 0 : index
    %c0_6 = arith.constant 0 : index
    %6 = vector.load %arg5[%c0_5, %c0_6] : memref<4x4xf32, #tpu.memory_space<vmem>>, vector<4x4xf32>
    %c0_7 = arith.constant 0 : index
    %c0_8 = arith.constant 0 : index
    %c0_9 = arith.constant 0 : index
    %7 = vector.load %arg3[%c0_7, %c0_8, %c0_9] : memref<1x4x36xf32, #tpu.memory_space<vmem>>, vector<1x4x36xf32>
    %8 = vector.shape_cast %7 : vector<1x4x36xf32> to vector<4x36xf32>
    %cst_10 = arith.constant 0.000000e+00 : f32
    %9 = vector.broadcast %cst_10 : f32 to vector<4x36xf32>
    %10 = arith.maximumf %8, %9 : vector<4x36xf32>
    %cst_11 = arith.constant dense<0.000000e+00> : vector<4x36xf32>
    %11 = tpu.matmul %6, %10, %cst_11 {dimension_numbers = #tpu.dot_dimension_numbers<[1], [0], [0], [1], [0, 0, 1, 1], [], []>} : vector<4x4xf32>, vector<4x36xf32>, vector<4x36xf32> -> vector<4x36xf32>
    %12 = tpu.concatenate %5, %11 in 0 : vector<4x36xf32>, vector<4x36xf32> -> vector<8x36xf32>
    %c0_12 = arith.constant 0 : index
    %c0_13 = arith.constant 0 : index
    %13 = vector.load %arg6[%c0_12, %c0_13] : memref<8x1xf32, #tpu.memory_space<vmem>>, vector<8x1xf32>
    %14 = vector.broadcast %13 : vector<8x1xf32> to vector<8x36xf32>
    %15 = arith.mulf %12, %14 : vector<8x36xf32>
    %c0_14 = arith.constant 0 : index
    %c0_15 = arith.constant 0 : index
    %16 = vector.load %arg7[%c0_14, %c0_15] : memref<8x1xf32, #tpu.memory_space<vmem>>, vector<8x1xf32>
    %17 = vector.broadcast %16 : vector<8x1xf32> to vector<8x36xf32>
    %18 = arith.addf %15, %17 : vector<8x36xf32>
    %c0_16 = arith.constant 0 : index
    %c0_17 = arith.constant 0 : index
    %c0_18 = arith.constant 0 : index
    %19 = vector.load %arg8[%c0_16, %c0_17, %c0_18] : memref<1x8x36xf32, #tpu.memory_space<vmem>>, vector<1x8x36xf32>
    %20 = vector.shape_cast %19 : vector<1x8x36xf32> to vector<8x36xf32>
    %21 = vector.shape_cast %18 : vector<8x36xf32> to vector<1x8x36xf32>
    tpu.vector_store %arg8[%c0_16, %c0_17, %c0_18], %21 {strides = array<i32>} : memref<1x8x36xf32, #tpu.memory_space<vmem>>, vector<1x8x36xf32>,
    return
  }
  func.func @transform_0(%arg0: i32, %arg1: i32) -> (i32, i32, i32) {
    %c0_i32 = arith.constant 0 : i32
    %c0_i32_0 = arith.constant 0 : i32
    return %arg0, %c0_i32, %arg1 : i32, i32, i32
  }
  func.func @transform_1(%arg0: i32, %arg1: i32) -> (i32, i32, i32) {
    %c0_i32 = arith.constant 0 : i32
    %c0_i32_0 = arith.constant 0 : i32
    return %arg0, %c0_i32, %arg1 : i32, i32, i32
  }
  func.func @transform_2(%arg0: i32, %arg1: i32) -> (i32, i32) {
    %c0_i32 = arith.constant 0 : i32
    %c0_i32_0 = arith.constant 0 : i32
    %c0_i32_1 = arith.constant 0 : i32
    return %c0_i32, %c0_i32_0 : i32, i32
  }
  func.func @transform_3(%arg0: i32, %arg1: i32) -> (i32, i32) {
    %c0_i32 = arith.constant 0 : i32
    %c0_i32_0 = arith.constant 0 : i32
    %c0_i32_1 = arith.constant 0 : i32
    return %c0_i32, %c0_i32_0 : i32, i32
  }
  func.func @transform_4(%arg0: i32, %arg1: i32) -> (i32, i32) {
    %c0_i32 = arith.constant 0 : i32
    %c0_i32_0 = arith.constant 0 : i32
    %c0_i32_1 = arith.constant 0 : i32
    return %c0_i32, %c0_i32_0 : i32, i32
  }
  func.func @transform_5(%arg0: i32, %arg1: i32) -> (i32, i32) {
    %c0_i32 = arith.constant 0 : i32
    %c0_i32_0 = arith.constant 0 : i32
    %c0_i32_1 = arith.constant 0 : i32
    return %c0_i32, %c0_i32_0 : i32, i32
  }
  func.func @transform_6(%arg0: i32, %arg1: i32) -> (i32, i32, i32) {
    %c0_i32 = arith.constant 0 : i32
    %c0_i32_0 = arith.constant 0 : i32
    return %arg0, %c0_i32, %arg1 : i32, i32, i32
  }
}

</mosaic_0001>

<llo_original>
// kernel: factorized_reduce.3
$region0: #{factorized_reduce.3}
  #allocation0 [shape = 'u32[]', space=smem, size = 0x4, offset = 0x4, fixed_abs, tag = 'smem constant byte address 0x4 - core index']
  #allocation1 [shape = 'u32[144,128]{1,0:T(1,128)}', space=vmem, size = 0x12000, scoped, tag = 'internal scratch']
  %s0 = inlined_call_operand.vmem [shape: f32[2,4,36], index: 0, kind: input, shape index: {}]
  %s1 = inlined_call_operand.vmem [shape: f32[2,4,36], index: 1, kind: input, shape index: {}]
  %s2 = inlined_call_operand.vmem [shape: f32[4,4], index: 2, kind: input, shape index: {}]
  %s3 = inlined_call_operand.vmem [shape: f32[4,4], index: 3, kind: input, shape index: {}]
  %s4 = inlined_call_operand.vmem [shape: f32[8,1], index: 4, kind: input, shape index: {}]
  %s5 = inlined_call_operand.vmem [shape: f32[8,1], index: 5, kind: input, shape index: {}]
  %s6 = inlined_call_operand.vmem [shape: f32[2,8,36], index: 6, kind: output, shape index: {}]
  %s7 = sld [smem:[#allocation0]]
  $region57: #{factorized_reduce.3} parent=0
    _
  %s9 = ssub.s32 1, %s7
  %s10 = scalar_select 0, %s9, %s7
  loop: start=0, step=1, limit=4
  $region2: #{factorized_reduce.3} parent=0 // loop_pre_header
    _
  $region3: #{factorized_reduce.3} parent=0 // loop_header
    %s12 = sphi 0, %s16
    %p13 = scmp.ge.s32.totalorder %s12, 4
    %s19 = sphi 0, %s31
    %s20 = sphi 0, %s27
    %s21 = sphi 0, %s19
    %s22 = sphi 0, %s20
    %s23 = sphi 0, %s21
    %s24 = sphi 0, %s22
    %s36 = sphi 0, %s38
    %s39 = sphi 0, %s36
    %s40 = sphi 0, %s39
    %s56 = sphi 0, %s40
    %s64 = sphi 0, %s66
    %s67 = sphi 0, %s64
    %s68 = sphi 0, %s67
    %s84 = sphi 0, %s68
    %s88 = sphi 0, %s88
    %s90 = sphi 0, %s88
    %s91 = sphi 0, %s90
    %s105 = sphi 0, %s91
    %s109 = sphi 0, %s109
    %s111 = sphi 0, %s109
    %s112 = sphi 0, %s111
    %s126 = sphi 0, %s112
    %s130 = sphi 0, %s130
    %s132 = sphi 0, %s130
    %s133 = sphi 0, %s132
    %s147 = sphi 0, %s133
    %s151 = sphi 0, %s151
    %s153 = sphi 0, %s151
    %s154 = sphi 0, %s153
    %s168 = sphi 0, %s154
    %s176 = sphi 0, %s178
    %s179 = sphi 0, %s176
    %s180 = sphi 0, %s179
    %s196 = sphi 0, %s180
  $region4: #{factorized_reduce.3} parent=0 // loop_header_branch
    %15 = sbr.rel (%p13) target = $region8
  $region5: #{factorized_reduce.3} parent=0 // loop_body
    %s17 = ssub.s32 %s12, 1
    %s18 = ssub.s32 %s12, 2
    %s25 = sadd.s32 1, %s20
    %p26 = scmp.ge.s32.totalorder %s25, 1
    %s27 = scalar_select %p26, 0, %s25
    %s28 = sadd.s32 1, %s19
    %s29 = scalar_select %p26, %s28, %s19
    %p30 = scmp.ge.s32.totalorder %s29, 2
    %s31 = scalar_select %p30, 0, %s29
    %s32 = ssub.s32 %s19, %s31
    %s33 = ssub.s32 %s20, %s27
    %s34 = sor.u32 %s32, %s33
    %p35 = scmp.eq.s32.totalorder %s34, 0
    %s37 = sadd.s32 %s36, 1
    %s38 = scalar_select %p35, %s36, %s37
    %p41 = pneg %p35
    %p42 = scmp.eq.s32.totalorder %s12, 1
    %p43 = por %p41, %p42
    %p44 = scmp.ne.s32.totalorder %s36, %s39
    %p45 = scmp.eq.s32.totalorder %s12, 0
    %p46 = por %p44, %p45
    %p47 = scmp.ne.s32.totalorder %s36, %s39
    %p48 = scmp.eq.s32.totalorder %s17, 1
    %p49 = por %p47, %p48
    %p50 = scmp.ne.s32.totalorder %s39, %s40
    %p51 = scmp.eq.s32.totalorder %s17, 0
    %p52 = por %p50, %p51
    %p53 = scmp.ne.s32.totalorder %s39, %s40
    %p54 = scmp.eq.s32.totalorder %s18, 1
    %p55 = por %p53, %p54
    %p57 = scmp.ne.s32.totalorder %s40, %s56
    %p58 = scmp.eq.s32.totalorder %s18, 0
    %p59 = por %p57, %p58
    %s60 = ssub.s32 %s19, %s31
    %s61 = ssub.s32 %s20, %s27
    %s62 = sor.u32 %s60, %s61
    %p63 = scmp.eq.s32.totalorder %s62, 0
    %s65 = sadd.s32 %s64, 1
    %s66 = scalar_select %p63, %s64, %s65
    %p69 = pneg %p63
    %p70 = scmp.eq.s32.totalorder %s12, 1
    %p71 = por %p69, %p70
    %p72 = scmp.ne.s32.totalorder %s64, %s67
    %p73 = scmp.eq.s32.totalorder %s12, 0
    %p74 = por %p72, %p73
    %p75 = scmp.ne.s32.totalorder %s64, %s67
    %p76 = scmp.eq.s32.totalorder %s17, 1
    %p77 = por %p75, %p76
    %p78 = scmp.ne.s32.totalorder %s67, %s68
    %p79 = scmp.eq.s32.totalorder %s17, 0
    %p80 = por %p78, %p79
    %p81 = scmp.ne.s32.totalorder %s67, %s68
    %p82 = scmp.eq.s32.totalorder %s18, 1
    %p83 = por %p81, %p82
    %p85 = scmp.ne.s32.totalorder %s68, %s84
    %p86 = scmp.eq.s32.totalorder %s18, 0
    %p87 = por %p85, %p86
    %s89 = sadd.s32 %s88, 1
    %p92 = scmp.eq.s32.totalorder %s12, 1
    %p93 = scmp.ne.s32.totalorder %s88, %s90
    %p94 = scmp.eq.s32.totalorder %s12, 0
    %p95 = por %p93, %p94
    %p96 = scmp.ne.s32.totalorder %s88, %s90
    %p97 = scmp.eq.s32.totalorder %s17, 1
    %p98 = por %p96, %p97
    %p99 = scmp.ne.s32.totalorder %s90, %s91
    %p100 = scmp.eq.s32.totalorder %s17, 0
    %p101 = por %p99, %p100
    %p102 = scmp.ne.s32.totalorder %s90, %s91
    %p103 = scmp.eq.s32.totalorder %s18, 1
    %p104 = por %p102, %p103
    %p106 = scmp.ne.s32.totalorder %s91, %s105
    %p107 = scmp.eq.s32.totalorder %s18, 0
    %p108 = por %p106, %p107
    %s110 = sadd.s32 %s109, 1
    %p113 = scmp.eq.s32.totalorder %s12, 1
    %p114 = scmp.ne.s32.totalorder %s109, %s111
    %p115 = scmp.eq.s32.totalorder %s12, 0
    %p116 = por %p114, %p115
    %p117 = scmp.ne.s32.totalorder %s109, %s111
    %p118 = scmp.eq.s32.totalorder %s17, 1
    %p119 = por %p117, %p118
    %p120 = scmp.ne.s32.totalorder %s111, %s112
    %p121 = scmp.eq.s32.totalorder %s17, 0
    %p122 = por %p120, %p121
    %p123 = scmp.ne.s32.totalorder %s111, %s112
    %p124 = scmp.eq.s32.totalorder %s18, 1
    %p125 = por %p123, %p124
    %p127 = scmp.ne.s32.totalorder %s112, %s126
    %p128 = scmp.eq.s32.totalorder %s18, 0
    %p129 = por %p127, %p128
    %s131 = sadd.s32 %s130, 1
    %p134 = scmp.eq.s32.totalorder %s12, 1
    %p135 = scmp.ne.s32.totalorder %s130, %s132
    %p136 = scmp.eq.s32.totalorder %s12, 0
    %p137 = por %p135, %p136
    %p138 = scmp.ne.s32.totalorder %s130, %s132
    %p139 = scmp.eq.s32.totalorder %s17, 1
    %p140 = por %p138, %p139
    %p141 = scmp.ne.s32.totalorder %s132, %s133
    %p142 = scmp.eq.s32.totalorder %s17, 0
    %p143 = por %p141, %p142
    %p144 = scmp.ne.s32.totalorder %s132, %s133
    %p145 = scmp.eq.s32.totalorder %s18, 1
    %p146 = por %p144, %p145
    %p148 = scmp.ne.s32.totalorder %s133, %s147
    %p149 = scmp.eq.s32.totalorder %s18, 0
    %p150 = por %p148, %p149
    %s152 = sadd.s32 %s151, 1
    %p155 = scmp.eq.s32.totalorder %s12, 1
    %p156 = scmp.ne.s32.totalorder %s151, %s153
    %p157 = scmp.eq.s32.totalorder %s12, 0
    %p158 = por %p156, %p157
    %p159 = scmp.ne.s32.totalorder %s151, %s153
    %p160 = scmp.eq.s32.totalorder %s17, 1
    %p161 = por %p159, %p160
    %p162 = scmp.ne.s32.totalorder %s153, %s154
    %p163 = scmp.eq.s32.totalorder %s17, 0
    %p164 = por %p162, %p163
    %p165 = scmp.ne.s32.totalorder %s153, %s154
    %p166 = scmp.eq.s32.totalorder %s18, 1
    %p167 = por %p165, %p166
    %p169 = scmp.ne.s32.totalorder %s154, %s168
    %p170 = scmp.eq.s32.totalorder %s18, 0
    %p171 = por %p169, %p170
    %s172 = ssub.s32 %s19, %s31
    %s173 = ssub.s32 %s20, %s27
    %s174 = sor.u32 %s172, %s173
    %p175 = scmp.eq.s32.totalorder %s174, 0
    %s177 = sadd.s32 %s176, 1
    %s178 = scalar_select %p175, %s176, %s177
    %p181 = pneg %p175
    %p182 = scmp.eq.s32.totalorder %s12, 1
    %p183 = por %p181, %p182
    %p184 = scmp.ne.s32.totalorder %s176, %s179
    %p185 = scmp.eq.s32.totalorder %s12, 0
    %p186 = por %p184, %p185
    %p187 = scmp.ne.s32.totalorder %s176, %s179
    %p188 = scmp.eq.s32.totalorder %s17, 1
    %p189 = por %p187, %p188
    %p190 = scmp.ne.s32.totalorder %s179, %s180
    %p191 = scmp.eq.s32.totalorder %s17, 0
    %p192 = por %p190, %p191
    %p193 = scmp.ne.s32.totalorder %s179, %s180
    %p194 = scmp.eq.s32.totalorder %s18, 1
    %p195 = por %p193, %p194
    %p197 = scmp.ne.s32.totalorder %s180, %s196
    %p198 = scmp.eq.s32.totalorder %s18, 0
    %p199 = por %p197, %p198
    %p200 = scmp.le.s32.totalorder 1, %s12
    %p201 = scmp.lt.s32.totalorder %s12, 3
    %p202 = pnand %p200, %p201
    %p203 = pneg %p202
    // Predicated region
    $region9: #{factorized_reduce.3} parent=5 // pred_check
      _
    $region10: #{factorized_reduce.3} parent=5 // pred_check_branch
      %205 = sbr.rel (%p202) target = $region12
    $region11: #{factorized_reduce.3} parent=5 // pred_region
      %s206 = ssub.s32 %s12, 1
      // Predicated region
      $region13: #{factorized_reduce.3} parent=11 // pred_check
        %p207 = pneg %p101
      $region14: #{factorized_reduce.3} parent=11 // pred_check_branch
        %209 = sbr.rel (%p207) target = $region16
      $region15: #{factorized_reduce.3} parent=11 // pred_region
        _
      $region16: #{factorized_reduce.3} parent=11 // pred_fallthru
        _
      // Predicated region
      $region17: #{factorized_reduce.3} parent=11 // pred_check
        %p210 = pneg %p122
      $region18: #{factorized_reduce.3} parent=11 // pred_check_branch
        %212 = sbr.rel (%p210) target = $region20
      $region19: #{factorized_reduce.3} parent=11 // pred_region
        _
      $region20: #{factorized_reduce.3} parent=11 // pred_fallthru
        _
      // Predicated region
      $region21: #{factorized_reduce.3} parent=11 // pred_check
        %p213 = pneg %p143
      $region22: #{factorized_reduce.3} parent=11 // pred_check_branch
        %215 = sbr.rel (%p213) target = $region24
      $region23: #{factorized_reduce.3} parent=11 // pred_region
        _
      $region24: #{factorized_reduce.3} parent=11 // pred_fallthru
        _
      // Predicated region
      $region25: #{factorized_reduce.3} parent=11 // pred_check
        %p216 = pneg %p164
      $region26: #{factorized_reduce.3} parent=11 // pred_check_branch
        %218 = sbr.rel (%p216) target = $region28
      $region27: #{factorized_reduce.3} parent=11 // pred_region
        _
      $region28: #{factorized_reduce.3} parent=11 // pred_fallthru
        _
    $region12: #{factorized_reduce.3} parent=5 // pred_fallthru
      _
    %p219 = scmp.lt.s32.totalorder %s12, 2
    // Predicated region
    $region29: #{factorized_reduce.3} parent=5 // pred_check
      %p220 = pneg %p219
    $region30: #{factorized_reduce.3} parent=5 // pred_check_branch
      %222 = sbr.rel (%p220) target = $region32
    $region31: #{factorized_reduce.3} parent=5 // pred_region
      // Predicated region
      $region33: #{factorized_reduce.3} parent=31 // pred_check
        %p223 = pneg %p46
      $region34: #{factorized_reduce.3} parent=31 // pred_check_branch
        %225 = sbr.rel (%p223) target = $region36
      $region35: #{factorized_reduce.3} parent=31 // pred_region
        %p226 = scmp.lt.s32.totalorder %s19, 1
        %s227 = scalar_select %p226, %s19, 1
        %p228 = scmp.lt.s32.totalorder %s20, 0
        %s229 = scalar_select %p228, %s20, 0
        %s230 = sadd.s32 %s229, %s227
        %s231 = smul.addr %s230, 4
        %s232 = scalar_lea.vmem %s0, %s231
      $region36: #{factorized_reduce.3} parent=31 // pred_fallthru
        _
      // Predicated region
      $region37: #{factorized_reduce.3} parent=31 // pred_check
        %p233 = pneg %p74
      $region38: #{factorized_reduce.3} parent=31 // pred_check_branch
        %235 = sbr.rel (%p233) target = $region40
      $region39: #{factorized_reduce.3} parent=31 // pred_region
        %p236 = scmp.lt.s32.totalorder %s19, 1
        %s237 = scalar_select %p236, %s19, 1
        %p238 = scmp.lt.s32.totalorder %s20, 0
        %s239 = scalar_select %p238, %s20, 0
        %s240 = sadd.s32 %s239, %s237
        %s241 = smul.addr %s240, 4
        %s242 = scalar_lea.vmem %s1, %s241
      $region40: #{factorized_reduce.3} parent=31 // pred_fallthru
        _
    $region32: #{factorized_reduce.3} parent=5 // pred_fallthru
      _
    %p243 = scmp.le.s32.totalorder 1, %s12
    %p244 = scmp.lt.s32.totalorder %s12, 3
    %p245 = pnand %p243, %p244
    %p246 = pneg %p245
    // Predicated region
    $region41: #{factorized_reduce.3} parent=5 // pred_check
      _
    $region42: #{factorized_reduce.3} parent=5 // pred_check_branch
      %248 = sbr.rel (%p245) target = $region44
    $region43: #{factorized_reduce.3} parent=5 // pred_region
      %s249 = ssub.s32 %s12, 1
      %p250 = scmp.lt.s32.totalorder %s21, 1
      %s251 = scalar_select %p250, %s21, 1
      %p252 = scmp.lt.s32.totalorder %s22, 0
      %s253 = scalar_select %p252, %s22, 0
      %s254 = sadd.s32 %s253, %s251
      %s255 = smul.addr %s254, 4
      %s256 = scalar_lea.vmem %s0, %s255
      %p257 = pneg %p52
      %p258 = pneg %p49
      %p259 = scmp.lt.s32.totalorder %s21, 1
      %s260 = scalar_select %p259, %s21, 1
      %p261 = scmp.lt.s32.totalorder %s22, 0
      %s262 = scalar_select %p261, %s22, 0
      %s263 = sadd.s32 %s262, %s260
      %s264 = smul.addr %s263, 4
      %s265 = scalar_lea.vmem %s1, %s264
      %p266 = pneg %p80
      %p267 = pneg %p77
      %p268 = pneg %p101
      %p269 = pneg %p98
      %p270 = pneg %p122
      %p271 = pneg %p119
      %p272 = pneg %p143
      %p273 = pneg %p140
      %p274 = pneg %p164
      %p275 = pneg %p161
      %p276 = pneg %p192
      %p277 = pneg %p189
      %p278 = scmp.lt.s32.totalorder %s21, 1
      %s279 = scalar_select %p278, %s21, 1
      %p280 = scmp.lt.s32.totalorder %s22, 0
      %s281 = scalar_select %p280, %s22, 0
      %s282 = sadd.s32 %s281, %s279
      %s283 = smul.addr %s282, 8
      %s284 = scalar_lea.vmem %s6, %s283
      %p285 = scmp.lt.s32.totalorder %s21, 1
      %s286 = scalar_select %p285, %s21, 1
      %p287 = scmp.lt.s32.totalorder %s22, 0
      %s288 = scalar_select %p287, %s22, 0
      %s289 = sadd.s32 %s288, %s286
      %s290 = smul.addr %s289, 4
      %s291 = scalar_lea.vmem %s0, %s290
      %p292 = scmp.lt.s32.totalorder %s21, 1
      %s293 = scalar_select %p292, %s21, 1
      %p294 = scmp.lt.s32.totalorder %s22, 0
      %s295 = scalar_select %p294, %s22, 0
      %s296 = sadd.s32 %s295, %s293
      %s297 = smul.addr %s296, 4
      %s298 = scalar_lea.vmem %s1, %s297
      %p299 = scmp.lt.s32.totalorder %s21, 1
      %s300 = scalar_select %p299, %s21, 1
      %p301 = scmp.lt.s32.totalorder %s22, 0
      %s302 = scalar_select %p301, %s22, 0
      %s303 = sadd.s32 %s302, %s300
      %s304 = smul.addr %s303, 8
      %s305 = scalar_lea.vmem %s6, %s304
      %v306 = vld [vmem:[%s2] sm:$0xf]
      %v307 = vld [vmem:[%s291] sm:$0xf]
      %v308 = vmax.f32 %v307, 0.0
      %vm309 = vcmask 31744
      %v311 = vsel %vm309, %v306, 0
      %vm313 = vcmask 1043456
      %v315 = vsel %vm313, %v308, 0
      %317 = vmatprep.subr.mxu0 0.0
      %318 = vmatpush1.msra.mxu0 %v315
      %319 = vmatprep.subr.mxu0 0.0
      %320 = vmatpush1.msra.mxu0 0.0
      %321 = vmatprep.subr.mxu0 0.0
      %322 = vmatpush1.msra.mxu0 0.0
      %323 = vmatprep.subr.mxu0 0.0
      %324 = vmatpush1.msra.mxu0 0.0
      %325 = vmatprep.subr.mxu0 0.0
      %326 = vmatpush1.msra.mxu0 0.0
      %327 = vmatprep.subr.mxu0 0.0
      %328 = vmatpush1.msra.mxu0 0.0
      %329 = vmatprep.subr.mxu0 0.0
      %330 = vmatpush1.msra.mxu0 0.0
      %331 = vmatprep.subr.mxu0 0.0
      %332 = vmatpush1.msra.mxu0 0.0
      %333 = vmatprep.subr.mxu0 0.0
      %334 = vmatpush1.msra.mxu0 0.0
      %335 = vmatprep.subr.mxu0 0.0
      %336 = vmatpush1.msra.mxu0 0.0
      %337 = vmatprep.subr.mxu0 0.0
      %338 = vmatpush1.msra.mxu0 0.0
      %339 = vmatprep.subr.mxu0 0.0
      %340 = vmatpush1.msra.mxu0 0.0
      %341 = vmatprep.subr.mxu0 0.0
      %342 = vmatpush1.msra.mxu0 0.0
      %343 = vmatprep.subr.mxu0 0.0
      %344 = vmatpush1.msra.mxu0 0.0
      %345 = vmatprep.subr.mxu0 0.0
      %346 = vmatpush1.msra.mxu0 0.0
      %347 = vmatprep.subr.mxu0 0.0
      %348 = vmatpush1.msra.mxu0 0.0
      %349 = vmatprep.subr.mxu0 0.0
      %350 = vmatpush1.msra.mxu0 0.0
      %351 = vmatprep.subr.mxu0 0.0
      %352 = vmatpush1.msra.mxu0 0.0
      %353 = vmatprep.subr.mxu0 0.0
      %354 = vmatpush1.msra.mxu0 0.0
      %355 = vmatprep.subr.mxu0 0.0
      %356 = vmatpush1.msra.mxu0 0.0
      %357 = vmatprep.subr.mxu0 0.0
      %358 = vmatpush1.msra.mxu0 0.0
      %359 = vmatprep.subr.mxu0 0.0
      %360 = vmatpush1.msra.mxu0 0.0
      %361 = vmatprep.subr.mxu0 0.0
      %362 = vmatpush1.msra.mxu0 0.0
      %363 = vmatprep.subr.mxu0 0.0
      %364 = vmatpush1.msra.mxu0 0.0
      %365 = vmatprep.subr.mxu0 0.0
      %366 = vmatpush1.msra.mxu0 0.0
      %367 = vmatprep.subr.mxu0 0.0
      %368 = vmatpush1.msra.mxu0 0.0
      %369 = vmatprep.subr.mxu0 0.0
      %370 = vmatpush1.msra.mxu0 0.0
      %371 = vmatprep.subr.mxu0 0.0
      %372 = vmatpush1.msra.mxu0 0.0
      %373 = vmatprep.subr.mxu0 0.0
      %374 = vmatpush1.msra.mxu0 0.0
      %375 = vmatprep.subr.mxu0 0.0
      %376 = vmatpush1.msra.mxu0 0.0
      %377 = vmatprep.subr.mxu0 0.0
      %378 = vmatpush1.msra.mxu0 0.0
      %379 = vmatprep.subr.mxu0 0.0
      %380 = vmatpush1.msra.mxu0 0.0
      %381 = vmatprep.mubr.f32.mxu0 0.0
      %382 = vmatmul.mubr.f32.gmra.mrb[0].mxu0 %v311
      %v383 = vpop.f32.mrb[0].mxu0
      %v384 = vadd.f32 0.0, %v383
      %v385 = vpop.f32.mrb[0].mxu0
      %386 = vdwg.mxu0
      %v387 = vld [vmem:[%s3] sm:$0xf]
      %v388 = vld [vmem:[%s298] sm:$0xf]
      %v389 = vmax.f32 %v388, 0.0
      %v391 = vsel %vm309, %v387, 0
      %v394 = vsel %vm313, %v389, 0
      %396 = vmatprep.subr.mxu0 0.0
      %397 = vmatpush1.msra.mxu0 %v394
      %398 = vmatprep.subr.mxu0 0.0
      %399 = vmatpush1.msra.mxu0 0.0
      %400 = vmatprep.subr.mxu0 0.0
      %401 = vmatpush1.msra.mxu0 0.0
      %402 = vmatprep.subr.mxu0 0.0
      %403 = vmatpush1.msra.mxu0 0.0
      %404 = vmatprep.subr.mxu0 0.0
      %405 = vmatpush1.msra.mxu0 0.0
      %406 = vmatprep.subr.mxu0 0.0
      %407 = vmatpush1.msra.mxu0 0.0
      %408 = vmatprep.subr.mxu0 0.0
      %409 = vmatpush1.msra.mxu0 0.0
      %410 = vmatprep.subr.mxu0 0.0
      %411 = vmatpush1.msra.mxu0 0.0
      %412 = vmatprep.subr.mxu0 0.0
      %413 = vmatpush1.msra.mxu0 0.0
      %414 = vmatprep.subr.mxu0 0.0
      %415 = vmatpush1.msra.mxu0 0.0
      %416 = vmatprep.subr.mxu0 0.0
      %417 = vmatpush1.msra.mxu0 0.0
      %418 = vmatprep.subr.mxu0 0.0
      %419 = vmatpush1.msra.mxu0 0.0
      %420 = vmatprep.subr.mxu0 0.0
      %421 = vmatpush1.msra.mxu0 0.0
      %422 = vmatprep.subr.mxu0 0.0
      %423 = vmatpush1.msra.mxu0 0.0
      %424 = vmatprep.subr.mxu0 0.0
      %425 = vmatpush1.msra.mxu0 0.0
      %426 = vmatprep.subr.mxu0 0.0
      %427 = vmatpush1.msra.mxu0 0.0
      %428 = vmatprep.subr.mxu0 0.0
      %429 = vmatpush1.msra.mxu0 0.0
      %430 = vmatprep.subr.mxu0 0.0
      %431 = vmatpush1.msra.mxu0 0.0
      %432 = vmatprep.subr.mxu0 0.0
      %433 = vmatpush1.msra.mxu0 0.0
      %434 = vmatprep.subr.mxu0 0.0
      %435 = vmatpush1.msra.mxu0 0.0
      %436 = vmatprep.subr.mxu0 0.0
      %437 = vmatpush1.msra.mxu0 0.0
      %438 = vmatprep.subr.mxu0 0.0
      %439 = vmatpush1.msra.mxu0 0.0
      %440 = vmatprep.subr.mxu0 0.0
      %441 = vmatpush1.msra.mxu0 0.0
      %442 = vmatprep.subr.mxu0 0.0
      %443 = vmatpush1.msra.mxu0 0.0
      %444 = vmatprep.subr.mxu0 0.0
      %445 = vmatpush1.msra.mxu0 0.0
      %446 = vmatprep.subr.mxu0 0.0
      %447 = vmatpush1.msra.mxu0 0.0
      %448 = vmatprep.subr.mxu0 0.0
      %449 = vmatpush1.msra.mxu0 0.0
      %450 = vmatprep.subr.mxu0 0.0
      %451 = vmatpush1.msra.mxu0 0.0
      %452 = vmatprep.subr.mxu0 0.0
      %453 = vmatpush1.msra.mxu0 0.0
      %454 = vmatprep.subr.mxu0 0.0
      %455 = vmatpush1.msra.mxu0 0.0
      %456 = vmatprep.subr.mxu0 0.0
      %457 = vmatpush1.msra.mxu0 0.0
      %458 = vmatprep.subr.mxu0 0.0
      %459 = vmatpush1.msra.mxu0 0.0
      %460 = vmatprep.mubr.f32.mxu0 0.0
      %461 = vmatmul.mubr.f32.gmra.mrb[0].mxu0 %v391
      %v462 = vpop.f32.mrb[0].mxu0
      %v463 = vadd.f32 0.0, %v462
      %v464 = vpop.f32.mrb[0].mxu0
      %465 = vdwg.mxu0
      %v467 = vrot.slane %v463, 4
      %v469 = vsel %vm313, %v384, %v467
      %v470 = vld [vmem:[%s4] sm:$0xff]
      %472 = vset.pattern.permute.xlu0 0
      %473 = vperm.xlu0 %472, %v470
      %v474 = vpop.permute.xlu0 %473
      %v476 = vmul.f32 %v469, %v474
      %v477 = vld [vmem:[%s5] sm:$0xff]
      %479 = vset.pattern.permute.xlu0 0
      %480 = vperm.xlu0 %479, %v477
      %v481 = vpop.permute.xlu0 %480
      %v483 = vadd.f32 %v476, %v481
      %vm484 = vcmask 293888
      %485 = vst.msk [vmem:[%s305] sm:$0xff] %vm484, %v483
      %p486 = scmp.lt.s32.totalorder %s21, 1
      %s487 = scalar_select %p486, %s21, 1
      %p488 = scmp.lt.s32.totalorder %s22, 0
      %s489 = scalar_select %p488, %s22, 0
      %s490 = sadd.s32 %s489, %s487
      %s491 = smul.addr %s490, 8
      %s492 = scalar_lea.vmem %s6, %s491
      // Predicated region
      $region45: #{factorized_reduce.3} parent=43 // pred_check
        %p493 = pneg %p189
      $region46: #{factorized_reduce.3} parent=43 // pred_check_branch
        %495 = sbr.rel (%p493) target = $region48
      $region47: #{factorized_reduce.3} parent=43 // pred_region
        _
      $region48: #{factorized_reduce.3} parent=43 // pred_fallthru
        _
    $region44: #{factorized_reduce.3} parent=5 // pred_fallthru
      _
    %p496 = scmp.le.s32.totalorder 2, %s12
    // Predicated region
    $region49: #{factorized_reduce.3} parent=5 // pred_check
      %p497 = pneg %p496
    $region50: #{factorized_reduce.3} parent=5 // pred_check_branch
      %499 = sbr.rel (%p497) target = $region52
    $region51: #{factorized_reduce.3} parent=5 // pred_region
      %s500 = ssub.s32 %s12, 2
      // Predicated region
      $region53: #{factorized_reduce.3} parent=51 // pred_check
        %p501 = pneg %p195
      $region54: #{factorized_reduce.3} parent=51 // pred_check_branch
        %503 = sbr.rel (%p501) target = $region56
      $region55: #{factorized_reduce.3} parent=51 // pred_region
        %p504 = scmp.lt.s32.totalorder %s23, 1
        %s505 = scalar_select %p504, %s23, 1
        %p506 = scmp.lt.s32.totalorder %s24, 0
        %s507 = scalar_select %p506, %s24, 0
        %s508 = sadd.s32 %s507, %s505
        %s509 = smul.addr %s508, 8
        %s510 = scalar_lea.vmem %s6, %s509
      $region56: #{factorized_reduce.3} parent=51 // pred_fallthru
        _
    $region52: #{factorized_reduce.3} parent=5 // pred_fallthru
      _
  $region6: #{factorized_reduce.3} parent=0 // loop_footer
    %s16 = sadd.s32 1, %s12
  $region7: #{factorized_reduce.3} parent=0 // loop_footer_branch
    %11 = sbr.rel target = $region3
  $region8: #{factorized_reduce.3} parent=0 // loop_exit
    _

// kernel: factorized_reduce.2
$region0: #{factorized_reduce.2}
  #allocation0 [shape = 'u32[]', space=smem, size = 0x4, offset = 0x4, fixed_abs, tag = 'smem constant byte address 0x4 - core index']
  #allocation1 [shape = 'u32[144,128]{1,0:T(1,128)}', space=vmem, size = 0x12000, scoped, tag = 'internal scratch']
  %s0 = inlined_call_operand.vmem [shape: f32[2,4,36], index: 0, kind: input, shape index: {}]
  %s1 = inlined_call_operand.vmem [shape: f32[2,4,36], index: 1, kind: input, shape index: {}]
  %s2 = inlined_call_operand.vmem [shape: f32[4,4], index: 2, kind: input, shape index: {}]
  %s3 = inlined_call_operand.vmem [shape: f32[4,4], index: 3, kind: input, shape index: {}]
  %s4 = inlined_call_operand.vmem [shape: f32[2,8,1], index: 4, kind: output, shape index: {0}]
  %s5 = inlined_call_operand.vmem [shape: f32[2,8,1], index: 5, kind: output, shape index: {1}]
  %6 = xla_tuple %s4, %s5
  %s7 = sld [smem:[#allocation0]]
  $region61: #{factorized_reduce.2} parent=0
    _
  %s9 = ssub.s32 1, %s7
  %s10 = scalar_select 0, %s9, %s7
  loop: start=0, step=1, limit=4
  $region2: #{factorized_reduce.2} parent=0 // loop_pre_header
    _
  $region3: #{factorized_reduce.2} parent=0 // loop_header
    %s12 = sphi 0, %s16
    %p13 = scmp.ge.s32.totalorder %s12, 4
    %s19 = sphi 0, %s31
    %s20 = sphi 0, %s27
    %s21 = sphi 0, %s19
    %s22 = sphi 0, %s20
    %s23 = sphi 0, %s21
    %s24 = sphi 0, %s22
    %s36 = sphi 0, %s38
    %s39 = sphi 0, %s36
    %s40 = sphi 0, %s39
    %s56 = sphi 0, %s40
    %s64 = sphi 0, %s66
    %s67 = sphi 0, %s64
    %s68 = sphi 0, %s67
    %s84 = sphi 0, %s68
    %s88 = sphi 0, %s88
    %s90 = sphi 0, %s88
    %s91 = sphi 0, %s90
    %s105 = sphi 0, %s91
    %s109 = sphi 0, %s109
    %s111 = sphi 0, %s109
    %s112 = sphi 0, %s111
    %s126 = sphi 0, %s112
    %s132 = sphi 0, %s134
    %s135 = sphi 0, %s132
    %s136 = sphi 0, %s135
    %s152 = sphi 0, %s136
    %s158 = sphi 0, %s160
    %s161 = sphi 0, %s158
    %s162 = sphi 0, %s161
    %s178 = sphi 0, %s162
  $region4: #{factorized_reduce.2} parent=0 // loop_header_branch
    %15 = sbr.rel (%p13) target = $region8
  $region5: #{factorized_reduce.2} parent=0 // loop_body
    %s17 = ssub.s32 %s12, 1
    %s18 = ssub.s32 %s12, 2
    %s25 = sadd.s32 1, %s20
    %p26 = scmp.ge.s32.totalorder %s25, 1
    %s27 = scalar_select %p26, 0, %s25
    %s28 = sadd.s32 1, %s19
    %s29 = scalar_select %p26, %s28, %s19
    %p30 = scmp.ge.s32.totalorder %s29, 2
    %s31 = scalar_select %p30, 0, %s29
    %s32 = ssub.s32 %s19, %s31
    %s33 = ssub.s32 %s20, %s27
    %s34 = sor.u32 %s32, %s33
    %p35 = scmp.eq.s32.totalorder %s34, 0
    %s37 = sadd.s32 %s36, 1
    %s38 = scalar_select %p35, %s36, %s37
    %p41 = pneg %p35
    %p42 = scmp.eq.s32.totalorder %s12, 1
    %p43 = por %p41, %p42
    %p44 = scmp.ne.s32.totalorder %s36, %s39
    %p45 = scmp.eq.s32.totalorder %s12, 0
    %p46 = por %p44, %p45
    %p47 = scmp.ne.s32.totalorder %s36, %s39
    %p48 = scmp.eq.s32.totalorder %s17, 1
    %p49 = por %p47, %p48
    %p50 = scmp.ne.s32.totalorder %s39, %s40
    %p51 = scmp.eq.s32.totalorder %s17, 0
    %p52 = por %p50, %p51
    %p53 = scmp.ne.s32.totalorder %s39, %s40
    %p54 = scmp.eq.s32.totalorder %s18, 1
    %p55 = por %p53, %p54
    %p57 = scmp.ne.s32.totalorder %s40, %s56
    %p58 = scmp.eq.s32.totalorder %s18, 0
    %p59 = por %p57, %p58
    %s60 = ssub.s32 %s19, %s31
    %s61 = ssub.s32 %s20, %s27
    %s62 = sor.u32 %s60, %s61
    %p63 = scmp.eq.s32.totalorder %s62, 0
    %s65 = sadd.s32 %s64, 1
    %s66 = scalar_select %p63, %s64, %s65
    %p69 = pneg %p63
    %p70 = scmp.eq.s32.totalorder %s12, 1
    %p71 = por %p69, %p70
    %p72 = scmp.ne.s32.totalorder %s64, %s67
    %p73 = scmp.eq.s32.totalorder %s12, 0
    %p74 = por %p72, %p73
    %p75 = scmp.ne.s32.totalorder %s64, %s67
    %p76 = scmp.eq.s32.totalorder %s17, 1
    %p77 = por %p75, %p76
    %p78 = scmp.ne.s32.totalorder %s67, %s68
    %p79 = scmp.eq.s32.totalorder %s17, 0
    %p80 = por %p78, %p79
    %p81 = scmp.ne.s32.totalorder %s67, %s68
    %p82 = scmp.eq.s32.totalorder %s18, 1
    %p83 = por %p81, %p82
    %p85 = scmp.ne.s32.totalorder %s68, %s84
    %p86 = scmp.eq.s32.totalorder %s18, 0
    %p87 = por %p85, %p86
    %s89 = sadd.s32 %s88, 1
    %p92 = scmp.eq.s32.totalorder %s12, 1
    %p93 = scmp.ne.s32.totalorder %s88, %s90
    %p94 = scmp.eq.s32.totalorder %s12, 0
    %p95 = por %p93, %p94
    %p96 = scmp.ne.s32.totalorder %s88, %s90
    %p97 = scmp.eq.s32.totalorder %s17, 1
    %p98 = por %p96, %p97
    %p99 = scmp.ne.s32.totalorder %s90, %s91
    %p100 = scmp.eq.s32.totalorder %s17, 0
    %p101 = por %p99, %p100
    %p102 = scmp.ne.s32.totalorder %s90, %s91
    %p103 = scmp.eq.s32.totalorder %s18, 1
    %p104 = por %p102, %p103
    %p106 = scmp.ne.s32.totalorder %s91, %s105
    %p107 = scmp.eq.s32.totalorder %s18, 0
    %p108 = por %p106, %p107
    %s110 = sadd.s32 %s109, 1
    %p113 = scmp.eq.s32.totalorder %s12, 1
    %p114 = scmp.ne.s32.totalorder %s109, %s111
    %p115 = scmp.eq.s32.totalorder %s12, 0
    %p116 = por %p114, %p115
    %p117 = scmp.ne.s32.totalorder %s109, %s111
    %p118 = scmp.eq.s32.totalorder %s17, 1
    %p119 = por %p117, %p118
    %p120 = scmp.ne.s32.totalorder %s111, %s112
    %p121 = scmp.eq.s32.totalorder %s17, 0
    %p122 = por %p120, %p121
    %p123 = scmp.ne.s32.totalorder %s111, %s112
    %p124 = scmp.eq.s32.totalorder %s18, 1
    %p125 = por %p123, %p124
    %p127 = scmp.ne.s32.totalorder %s112, %s126
    %p128 = scmp.eq.s32.totalorder %s18, 0
    %p129 = por %p127, %p128
    %s130 = ssub.s32 %s19, %s31
    %p131 = scmp.eq.s32.totalorder %s130, 0
    %s133 = sadd.s32 %s132, 1
    %s134 = scalar_select %p131, %s132, %s133
    %p137 = pneg %p131
    %p138 = scmp.eq.s32.totalorder %s12, 1
    %p139 = por %p137, %p138
    %p140 = scmp.ne.s32.totalorder %s132, %s135
    %p141 = scmp.eq.s32.totalorder %s12, 0
    %p142 = por %p140, %p141
    %p143 = scmp.ne.s32.totalorder %s132, %s135
    %p144 = scmp.eq.s32.totalorder %s17, 1
    %p145 = por %p143, %p144
    %p146 = scmp.ne.s32.totalorder %s135, %s136
    %p147 = scmp.eq.s32.totalorder %s17, 0
    %p148 = por %p146, %p147
    %p149 = scmp.ne.s32.totalorder %s135, %s136
    %p150 = scmp.eq.s32.totalorder %s18, 1
    %p151 = por %p149, %p150
    %p153 = scmp.ne.s32.totalorder %s136, %s152
    %p154 = scmp.eq.s32.totalorder %s18, 0
    %p155 = por %p153, %p154
    %s156 = ssub.s32 %s19, %s31
    %p157 = scmp.eq.s32.totalorder %s156, 0
    %s159 = sadd.s32 %s158, 1
    %s160 = scalar_select %p157, %s158, %s159
    %p163 = pneg %p157
    %p164 = scmp.eq.s32.totalorder %s12, 1
    %p165 = por %p163, %p164
    %p166 = scmp.ne.s32.totalorder %s158, %s161
    %p167 = scmp.eq.s32.totalorder %s12, 0
    %p168 = por %p166, %p167
    %p169 = scmp.ne.s32.totalorder %s158, %s161
    %p170 = scmp.eq.s32.totalorder %s17, 1
    %p171 = por %p169, %p170
    %p172 = scmp.ne.s32.totalorder %s161, %s162
    %p173 = scmp.eq.s32.totalorder %s17, 0
    %p174 = por %p172, %p173
    %p175 = scmp.ne.s32.totalorder %s161, %s162
    %p176 = scmp.eq.s32.totalorder %s18, 1
    %p177 = por %p175, %p176
    %p179 = scmp.ne.s32.totalorder %s162, %s178
    %p180 = scmp.eq.s32.totalorder %s18, 0
    %p181 = por %p179, %p180
    %p182 = scmp.le.s32.totalorder 1, %s12
    %p183 = scmp.lt.s32.totalorder %s12, 3
    %p184 = pnand %p182, %p183
    %p185 = pneg %p184
    // Predicated region
    $region9: #{factorized_reduce.2} parent=5 // pred_check
      _
    $region10: #{factorized_reduce.2} parent=5 // pred_check_branch
      %187 = sbr.rel (%p184) target = $region12
    $region11: #{factorized_reduce.2} parent=5 // pred_region
      %s188 = ssub.s32 %s12, 1
      // Predicated region
      $region13: #{factorized_reduce.2} parent=11 // pred_check
        %p189 = pneg %p101
      $region14: #{factorized_reduce.2} parent=11 // pred_check_branch
        %191 = sbr.rel (%p189) target = $region16
      $region15: #{factorized_reduce.2} parent=11 // pred_region
        _
      $region16: #{factorized_reduce.2} parent=11 // pred_fallthru
        _
      // Predicated region
      $region17: #{factorized_reduce.2} parent=11 // pred_check
        %p192 = pneg %p122
      $region18: #{factorized_reduce.2} parent=11 // pred_check_branch
        %194 = sbr.rel (%p192) target = $region20
      $region19: #{factorized_reduce.2} parent=11 // pred_region
        _
      $region20: #{factorized_reduce.2} parent=11 // pred_fallthru
        _
    $region12: #{factorized_reduce.2} parent=5 // pred_fallthru
      _
    %p195 = scmp.lt.s32.totalorder %s12, 2
    // Predicated region
    $region21: #{factorized_reduce.2} parent=5 // pred_check
      %p196 = pneg %p195
    $region22: #{factorized_reduce.2} parent=5 // pred_check_branch
      %198 = sbr.rel (%p196) target = $region24
    $region23: #{factorized_reduce.2} parent=5 // pred_region
      // Predicated region
      $region25: #{factorized_reduce.2} parent=23 // pred_check
        %p199 = pneg %p46
      $region26: #{factorized_reduce.2} parent=23 // pred_check_branch
        %201 = sbr.rel (%p199) target = $region28
      $region27: #{factorized_reduce.2} parent=23 // pred_region
        %p202 = scmp.lt.s32.totalorder %s19, 1
        %s203 = scalar_select %p202, %s19, 1
        %p204 = scmp.lt.s32.totalorder %s20, 0
        %s205 = scalar_select %p204, %s20, 0
        %s206 = sadd.s32 %s205, %s203
        %s207 = smul.addr %s206, 4
        %s208 = scalar_lea.vmem %s0, %s207
      $region28: #{factorized_reduce.2} parent=23 // pred_fallthru
        _
      // Predicated region
      $region29: #{factorized_reduce.2} parent=23 // pred_check
        %p209 = pneg %p74
      $region30: #{factorized_reduce.2} parent=23 // pred_check_branch
        %211 = sbr.rel (%p209) target = $region32
      $region31: #{factorized_reduce.2} parent=23 // pred_region
        %p212 = scmp.lt.s32.totalorder %s19, 1
        %s213 = scalar_select %p212, %s19, 1
        %p214 = scmp.lt.s32.totalorder %s20, 0
        %s215 = scalar_select %p214, %s20, 0
        %s216 = sadd.s32 %s215, %s213
        %s217 = smul.addr %s216, 4
        %s218 = scalar_lea.vmem %s1, %s217
      $region32: #{factorized_reduce.2} parent=23 // pred_fallthru
        _
    $region24: #{factorized_reduce.2} parent=5 // pred_fallthru
      _
    %p219 = scmp.le.s32.totalorder 1, %s12
    %p220 = scmp.lt.s32.totalorder %s12, 3
    %p221 = pnand %p219, %p220
    %p222 = pneg %p221
    // Predicated region
    $region33: #{factorized_reduce.2} parent=5 // pred_check
      _
    $region34: #{factorized_reduce.2} parent=5 // pred_check_branch
      %224 = sbr.rel (%p221) target = $region36
    $region35: #{factorized_reduce.2} parent=5 // pred_region
      %s225 = ssub.s32 %s12, 1
      %p226 = scmp.lt.s32.totalorder %s21, 1
      %s227 = scalar_select %p226, %s21, 1
      %p228 = scmp.lt.s32.totalorder %s22, 0
      %s229 = scalar_select %p228, %s22, 0
      %s230 = sadd.s32 %s229, %s227
      %s231 = smul.addr %s230, 4
      %s232 = scalar_lea.vmem %s0, %s231
      %p233 = pneg %p52
      %p234 = pneg %p49
      %p235 = scmp.lt.s32.totalorder %s21, 1
      %s236 = scalar_select %p235, %s21, 1
      %p237 = scmp.lt.s32.totalorder %s22, 0
      %s238 = scalar_select %p237, %s22, 0
      %s239 = sadd.s32 %s238, %s236
      %s240 = smul.addr %s239, 4
      %s241 = scalar_lea.vmem %s1, %s240
      %p242 = pneg %p80
      %p243 = pneg %p77
      %p244 = pneg %p101
      %p245 = pneg %p98
      %p246 = pneg %p122
      %p247 = pneg %p119
      %p248 = pneg %p148
      %p249 = pneg %p145
      %p250 = scmp.lt.s32.totalorder %s21, 1
      %s251 = scalar_select %p250, %s21, 1
      %s252 = smul.addr %s251, 8
      %s253 = scalar_lea.vmem %s4, %s252
      %p254 = pneg %p174
      %p255 = pneg %p171
      %p256 = scmp.lt.s32.totalorder %s21, 1
      %s257 = scalar_select %p256, %s21, 1
      %s258 = smul.addr %s257, 8
      %s259 = scalar_lea.vmem %s5, %s258
      %p260 = scmp.lt.s32.totalorder %s21, 1
      %s261 = scalar_select %p260, %s21, 1
      %p262 = scmp.lt.s32.totalorder %s22, 0
      %s263 = scalar_select %p262, %s22, 0
      %s264 = sadd.s32 %s263, %s261
      %s265 = smul.addr %s264, 4
      %s266 = scalar_lea.vmem %s0, %s265
      %p267 = scmp.lt.s32.totalorder %s21, 1
      %s268 = scalar_select %p267, %s21, 1
      %p269 = scmp.lt.s32.totalorder %s22, 0
      %s270 = scalar_select %p269, %s22, 0
      %s271 = sadd.s32 %s270, %s268
      %s272 = smul.addr %s271, 4
      %s273 = scalar_lea.vmem %s1, %s272
      %p274 = scmp.lt.s32.totalorder %s21, 1
      %s275 = scalar_select %p274, %s21, 1
      %s276 = smul.addr %s275, 8
      %s277 = scalar_lea.vmem %s4, %s276
      %p278 = scmp.lt.s32.totalorder %s21, 1
      %s279 = scalar_select %p278, %s21, 1
      %s280 = smul.addr %s279, 8
      %s281 = scalar_lea.vmem %s5, %s280
      %p282 = scmp.eq.s32.totalorder %s22, 0
      // Predicated region
      $region37: #{factorized_reduce.2} parent=35 // pred_check
        %p283 = pneg %p282
      $region38: #{factorized_reduce.2} parent=35 // pred_check_branch
        %285 = sbr.rel (%p283) target = $region40
      $region39: #{factorized_reduce.2} parent=35 // pred_region
        %vm286 = vcmask 7168
        %287 = vst.msk [vmem:[%s277] sm:$0xff] %vm286, 0.0
        %288 = vst.msk [vmem:[%s281] sm:$0xff] %vm286, 0.0
      $region40: #{factorized_reduce.2} parent=35 // pred_fallthru
        _
      %v289 = vld [vmem:[%s2] sm:$0xf]
      %v290 = vld [vmem:[%s266] sm:$0xf]
      %v291 = vmax.f32 %v290, 0.0
      %vm292 = vcmask 31744
      %v294 = vsel %vm292, %v289, 0
      %vm296 = vcmask 1043456
      %v298 = vsel %vm296, %v291, 0
      %300 = vmatprep.subr.mxu0 0.0
      %301 = vmatpush1.msra.mxu0 %v298
      %302 = vmatprep.subr.mxu0 0.0
      %303 = vmatpush1.msra.mxu0 0.0
      %304 = vmatprep.subr.mxu0 0.0
      %305 = vmatpush1.msra.mxu0 0.0
      %306 = vmatprep.subr.mxu0 0.0
      %307 = vmatpush1.msra.mxu0 0.0
      %308 = vmatprep.subr.mxu0 0.0
      %309 = vmatpush1.msra.mxu0 0.0
      %310 = vmatprep.subr.mxu0 0.0
      %311 = vmatpush1.msra.mxu0 0.0
      %312 = vmatprep.subr.mxu0 0.0
      %313 = vmatpush1.msra.mxu0 0.0
      %314 = vmatprep.subr.mxu0 0.0
      %315 = vmatpush1.msra.mxu0 0.0
      %316 = vmatprep.subr.mxu0 0.0
      %317 = vmatpush1.msra.mxu0 0.0
      %318 = vmatprep.subr.mxu0 0.0
      %319 = vmatpush1.msra.mxu0 0.0
      %320 = vmatprep.subr.mxu0 0.0
      %321 = vmatpush1.msra.mxu0 0.0
      %322 = vmatprep.subr.mxu0 0.0
      %323 = vmatpush1.msra.mxu0 0.0
      %324 = vmatprep.subr.mxu0 0.0
      %325 = vmatpush1.msra.mxu0 0.0
      %326 = vmatprep.subr.mxu0 0.0
      %327 = vmatpush1.msra.mxu0 0.0
      %328 = vmatprep.subr.mxu0 0.0
      %329 = vmatpush1.msra.mxu0 0.0
      %330 = vmatprep.subr.mxu0 0.0
      %331 = vmatpush1.msra.mxu0 0.0
      %332 = vmatprep.subr.mxu0 0.0
      %333 = vmatpush1.msra.mxu0 0.0
      %334 = vmatprep.subr.mxu0 0.0
      %335 = vmatpush1.msra.mxu0 0.0
      %336 = vmatprep.subr.mxu0 0.0
      %337 = vmatpush1.msra.mxu0 0.0
      %338 = vmatprep.subr.mxu0 0.0
      %339 = vmatpush1.msra.mxu0 0.0
      %340 = vmatprep.subr.mxu0 0.0
      %341 = vmatpush1.msra.mxu0 0.0
      %342 = vmatprep.subr.mxu0 0.0
      %343 = vmatpush1.msra.mxu0 0.0
      %344 = vmatprep.subr.mxu0 0.0
      %345 = vmatpush1.msra.mxu0 0.0
      %346 = vmatprep.subr.mxu0 0.0
      %347 = vmatpush1.msra.mxu0 0.0
      %348 = vmatprep.subr.mxu0 0.0
      %349 = vmatpush1.msra.mxu0 0.0
      %350 = vmatprep.subr.mxu0 0.0
      %351 = vmatpush1.msra.mxu0 0.0
      %352 = vmatprep.subr.mxu0 0.0
      %353 = vmatpush1.msra.mxu0 0.0
      %354 = vmatprep.subr.mxu0 0.0
      %355 = vmatpush1.msra.mxu0 0.0
      %356 = vmatprep.subr.mxu0 0.0
      %357 = vmatpush1.msra.mxu0 0.0
      %358 = vmatprep.subr.mxu0 0.0
      %359 = vmatpush1.msra.mxu0 0.0
      %360 = vmatprep.subr.mxu0 0.0
      %361 = vmatpush1.msra.mxu0 0.0
      %362 = vmatprep.subr.mxu0 0.0
      %363 = vmatpush1.msra.mxu0 0.0
      %364 = vmatprep.mubr.f32.mxu0 0.0
      %365 = vmatmul.mubr.f32.gmra.mrb[0].mxu0 %v294
      %v366 = vpop.f32.mrb[0].mxu0
      %v367 = vadd.f32 0.0, %v366
      %v368 = vpop.f32.mrb[0].mxu0
      %369 = vdwg.mxu0
      %v370 = vld [vmem:[%s3] sm:$0xf]
      %v371 = vld [vmem:[%s273] sm:$0xf]
      %v372 = vmax.f32 %v371, 0.0
      %v374 = vsel %vm292, %v370, 0
      %v377 = vsel %vm296, %v372, 0
      %379 = vmatprep.subr.mxu0 0.0
      %380 = vmatpush1.msra.mxu0 %v377
      %381 = vmatprep.subr.mxu0 0.0
      %382 = vmatpush1.msra.mxu0 0.0
      %383 = vmatprep.subr.mxu0 0.0
      %384 = vmatpush1.msra.mxu0 0.0
      %385 = vmatprep.subr.mxu0 0.0
      %386 = vmatpush1.msra.mxu0 0.0
      %387 = vmatprep.subr.mxu0 0.0
      %388 = vmatpush1.msra.mxu0 0.0
      %389 = vmatprep.subr.mxu0 0.0
      %390 = vmatpush1.msra.mxu0 0.0
      %391 = vmatprep.subr.mxu0 0.0
      %392 = vmatpush1.msra.mxu0 0.0
      %393 = vmatprep.subr.mxu0 0.0
      %394 = vmatpush1.msra.mxu0 0.0
      %395 = vmatprep.subr.mxu0 0.0
      %396 = vmatpush1.msra.mxu0 0.0
      %397 = vmatprep.subr.mxu0 0.0
      %398 = vmatpush1.msra.mxu0 0.0
      %399 = vmatprep.subr.mxu0 0.0
      %400 = vmatpush1.msra.mxu0 0.0
      %401 = vmatprep.subr.mxu0 0.0
      %402 = vmatpush1.msra.mxu0 0.0
      %403 = vmatprep.subr.mxu0 0.0
      %404 = vmatpush1.msra.mxu0 0.0
      %405 = vmatprep.subr.mxu0 0.0
      %406 = vmatpush1.msra.mxu0 0.0
      %407 = vmatprep.subr.mxu0 0.0
      %408 = vmatpush1.msra.mxu0 0.0
      %409 = vmatprep.subr.mxu0 0.0
      %410 = vmatpush1.msra.mxu0 0.0
      %411 = vmatprep.subr.mxu0 0.0
      %412 = vmatpush1.msra.mxu0 0.0
      %413 = vmatprep.subr.mxu0 0.0
      %414 = vmatpush1.msra.mxu0 0.0
      %415 = vmatprep.subr.mxu0 0.0
      %416 = vmatpush1.msra.mxu0 0.0
      %417 = vmatprep.subr.mxu0 0.0
      %418 = vmatpush1.msra.mxu0 0.0
      %419 = vmatprep.subr.mxu0 0.0
      %420 = vmatpush1.msra.mxu0 0.0
      %421 = vmatprep.subr.mxu0 0.0
      %422 = vmatpush1.msra.mxu0 0.0
      %423 = vmatprep.subr.mxu0 0.0
      %424 = vmatpush1.msra.mxu0 0.0
      %425 = vmatprep.subr.mxu0 0.0
      %426 = vmatpush1.msra.mxu0 0.0
      %427 = vmatprep.subr.mxu0 0.0
      %428 = vmatpush1.msra.mxu0 0.0
      %429 = vmatprep.subr.mxu0 0.0
      %430 = vmatpush1.msra.mxu0 0.0
      %431 = vmatprep.subr.mxu0 0.0
      %432 = vmatpush1.msra.mxu0 0.0
      %433 = vmatprep.subr.mxu0 0.0
      %434 = vmatpush1.msra.mxu0 0.0
      %435 = vmatprep.subr.mxu0 0.0
      %436 = vmatpush1.msra.mxu0 0.0
      %437 = vmatprep.subr.mxu0 0.0
      %438 = vmatpush1.msra.mxu0 0.0
      %439 = vmatprep.subr.mxu0 0.0
      %440 = vmatpush1.msra.mxu0 0.0
      %441 = vmatprep.subr.mxu0 0.0
      %442 = vmatpush1.msra.mxu0 0.0
      %443 = vmatprep.mubr.f32.mxu0 0.0
      %444 = vmatmul.mubr.f32.gmra.mrb[0].mxu0 %v374
      %v445 = vpop.f32.mrb[0].mxu0
      %v446 = vadd.f32 0.0, %v445
      %v447 = vpop.f32.mrb[0].mxu0
      %448 = vdwg.mxu0
      %vm449 = vcmask 289792
      %v450 = vsel %vm449, %v367, 0.0
      %451 = vadd.xlane.f32.xlu0 %v450
      %v452 = vpop.xlane.xlu0 %451
      %v453 = vsel %vm449, %v446, 0.0
      %454 = vadd.xlane.f32.xlu0 %v453
      %v455 = vpop.xlane.xlu0 %454
      %v457 = vrot.slane %v455, 4
      %v459 = vsel %vm296, %v452, %v457
      %v460 = vmul.f32 %v367, %v367
      %v461 = vsel %vm449, %v460, 0.0
      %462 = vadd.xlane.f32.xlu0 %v461
      %v463 = vpop.xlane.xlu0 %462
      %v464 = vmul.f32 %v446, %v446
      %v465 = vsel %vm449, %v464, 0.0
      %466 = vadd.xlane.f32.xlu0 %v465
      %v467 = vpop.xlane.xlu0 %466
      %v469 = vrot.slane %v467, 4
      %v471 = vsel %vm296, %v463, %v469
      %v472 = vld [vmem:[%s277] sm:$0xff]
      %v473 = vadd.f32 %v472, %v459
      %vm474 = vcmask 7168
      %475 = vst.msk [vmem:[%s277] sm:$0xff] %vm474, %v473
      %v476 = vld [vmem:[%s281] sm:$0xff]
      %v477 = vadd.f32 %v476, %v471
      %478 = vst.msk [vmem:[%s281] sm:$0xff] %vm474, %v477
      %p479 = scmp.lt.s32.totalorder %s21, 1
      %s480 = scalar_select %p479, %s21, 1
      %s481 = smul.addr %s480, 8
      %s482 = scalar_lea.vmem %s4, %s481
      %p483 = scmp.lt.s32.totalorder %s21, 1
      %s484 = scalar_select %p483, %s21, 1
      %s485 = smul.addr %s484, 8
      %s486 = scalar_lea.vmem %s5, %s485
      // Predicated region
      $region41: #{factorized_reduce.2} parent=35 // pred_check
        %p487 = pneg %p145
      $region42: #{factorized_reduce.2} parent=35 // pred_check_branch
        %489 = sbr.rel (%p487) target = $region44
      $region43: #{factorized_reduce.2} parent=35 // pred_region
        _
      $region44: #{factorized_reduce.2} parent=35 // pred_fallthru
        _
      // Predicated region
      $region45: #{factorized_reduce.2} parent=35 // pred_check
        %p490 = pneg %p171
      $region46: #{factorized_reduce.2} parent=35 // pred_check_branch
        %492 = sbr.rel (%p490) target = $region48
      $region47: #{factorized_reduce.2} parent=35 // pred_region
        _
      $region48: #{factorized_reduce.2} parent=35 // pred_fallthru
        _
    $region36: #{factorized_reduce.2} parent=5 // pred_fallthru
      _
    %p493 = scmp.le.s32.totalorder 2, %s12
    // Predicated region
    $region49: #{factorized_reduce.2} parent=5 // pred_check
      %p494 = pneg %p493
    $region50: #{factorized_reduce.2} parent=5 // pred_check_branch
      %496 = sbr.rel (%p494) target = $region52
    $region51: #{factorized_reduce.2} parent=5 // pred_region
      %s497 = ssub.s32 %s12, 2
      // Predicated region
      $region53: #{factorized_reduce.2} parent=51 // pred_check
        %p498 = pneg %p151
      $region54: #{factorized_reduce.2} parent=51 // pred_check_branch
        %500 = sbr.rel (%p498) target = $region56
      $region55: #{factorized_reduce.2} parent=51 // pred_region
        %p501 = scmp.lt.s32.totalorder %s23, 1
        %s502 = scalar_select %p501, %s23, 1
        %s503 = smul.addr %s502, 8
        %s504 = scalar_lea.vmem %s4, %s503
      $region56: #{factorized_reduce.2} parent=51 // pred_fallthru
        _
      // Predicated region
      $region57: #{factorized_reduce.2} parent=51 // pred_check
        %p505 = pneg %p177
      $region58: #{factorized_reduce.2} parent=51 // pred_check_branch
        %507 = sbr.rel (%p505) target = $region60
      $region59: #{factorized_reduce.2} parent=51 // pred_region
        %p508 = scmp.lt.s32.totalorder %s23, 1
        %s509 = scalar_select %p508, %s23, 1
        %s510 = smul.addr %s509, 8
        %s511 = scalar_lea.vmem %s5, %s510
      $region60: #{factorized_reduce.2} parent=51 // pred_fallthru
        _
    $region52: #{factorized_reduce.2} parent=5 // pred_fallthru
      _
  $region6: #{factorized_reduce.2} parent=0 // loop_footer
    %s16 = sadd.s32 1, %s12
  $region7: #{factorized_reduce.2} parent=0 // loop_footer_branch
    %11 = sbr.rel target = $region3
  $region8: #{factorized_reduce.2} parent=0 // loop_exit
    _

</llo_original>
